<compile_context>
chip_gen: v7x
topology: tpu7x:2x2x1
jax: 0.10.0
libtpu: 0.0.40
codegen_flags: <defaults>
</compile_context>

<pallas_src>
import numpy as np
import jax
import jax.numpy as jnp
from jax.experimental import pallas as pl
from jax.experimental.pallas import tpu as pltpu

LANES = 128
_NUM_SUMS = 8  # 7 used + 1 zero row to keep the sublane dim 8-aligned


def _partial_sums_kernel(b_ref, tb_ref, th_ref, gt_ref, m_ref,
                         tmap_ref, tmask_ref, out_ref):
    """One grid step: per-lane partial sums of all 7 masked reductions.

    Inputs are (tile_rows, 128) f32 blocks; output block is (1, 8, 128).
    """
    b = b_ref[...]        # pred['binary']
    tb = tb_ref[...]      # pred['thresh_binary']
    th = th_ref[...]      # pred['thresh']
    gt = gt_ref[...]      # batch['gt']
    m = m_ref[...]        # batch['mask']
    tmap = tmap_ref[...]  # batch['thresh_map']
    tmask = tmask_ref[...]  # batch['thresh_mask']

    bm = b * m
    gm = gt * m
    tbm = tb * m

    def rowsum(x):
        # Reduce over sublanes only; keep lanes -> (1, 128). The cross-lane
        # reduction happens once in the wrapper on a tiny array.
        return jnp.sum(x, axis=0, keepdims=True)

    part = jnp.concatenate(
        [
            rowsum(bm * gt),                     # 0: sum(binary*mask*gt)
            rowsum(gm),                          # 1: sum(gt*mask)
            rowsum(bm),                          # 2: sum(binary*mask)
            rowsum(tbm * gt),                    # 3: sum(thresh_binary*gt*mask)
            rowsum(tbm),                         # 4: sum(thresh_binary*mask)
            rowsum(jnp.abs(th - tmap) * tmask),  # 5: sum(|thresh-thresh_map|*thresh_mask)
            rowsum(tmask),                       # 6: sum(thresh_mask)
            jnp.zeros((1, LANES), jnp.float32),  # 7: padding row
        ],
        axis=0,
    )                                            # (8, 128)
    out_ref[0] = part


def _flatten_pad(a, r_pad):
    a = a.reshape(-1).astype(jnp.float32)
    total = r_pad * LANES
    a = jnp.pad(a, (0, total - a.shape[0]))
    return a.reshape(r_pad, LANES)


def l1_leaky_dice_loss(pred, batch, *, eps=1e-6, coverage_scale=5.0,
                       l1_scale=10.0, tile_rows=256):
    """Forward of L1LeakyDiceLoss. Returns (loss, metrics_dict)."""
    binary = pred['binary']
    thresh = pred['thresh']
    thresh_binary = pred['thresh_binary']
    gt = batch['gt']
    mask = batch['mask']
    thresh_map = batch['thresh_map']
    thresh_mask = batch['thresh_mask']

    # LeakyDiceLoss / DiceLoss: pred[:, 0, :, :], gt[:, 0, :, :] when 4-D.
    if binary.ndim == 4:
        binary = binary[:, 0]
    if thresh_binary.ndim == 4:
        thresh_binary = thresh_binary[:, 0]
    if gt.ndim == 4:
        gt = gt[:, 0]
    # MaskL1Loss: pred[:, 0]
    if thresh.ndim == 4:
        thresh = thresh[:, 0]

    arrays = (binary, thresh_binary, thresh, gt, mask, thresh_map, thresh_mask)
    L = int(np.prod(binary.shape))
    for a in arrays:
        assert int(np.prod(a.shape)) == L, "all loss inputs must have the same element count"

    # Lane-dense layout: rows x 128 lanes, rows 8-aligned; zero padding is
    # harmless because every accumulated term carries a mask factor.
    rows = -(-L // LANES)
    if rows <= tile_rows:
        r_pad = max(8, ((rows + 7) // 8) * 8)
        tr = r_pad
    else:
        r_pad = ((rows + tile_rows - 1) // tile_rows) * tile_rows
        tr = tile_rows
    grid = r_pad // tr

    args = [_flatten_pad(a, r_pad) for a in arrays]

    in_spec = pl.BlockSpec((tr, LANES), lambda i: (i, 0))
    partials = pl.pallas_call(
        _partial_sums_kernel,
        out_shape=jax.ShapeDtypeStruct((grid, _NUM_SUMS, LANES), jnp.float32),
        grid_spec=pltpu.PrefetchScalarGridSpec(
            num_scalar_prefetch=0,
            grid=(grid,),
            in_specs=[in_spec] * 7,
            out_specs=pl.BlockSpec((1, _NUM_SUMS, LANES), lambda i: (i, 0, 0)),
        ),
        compiler_params=pltpu.CompilerParams(
            dimension_semantics=("parallel",)),
    )(*args)

    # Final (tiny) reductions + scalar combination in plain JAX.
    s = jnp.sum(partials, axis=(0, 2))  # (8,)
    s_pmg, s_gm, s_pm, s_tbgm, s_tbm, s_l1, s_tm = (s[i] for i in range(7))

    # LeakyDiceLoss (coverage_scale)
    coverage = 1.0 - s_pmg / (s_gm + eps)
    excede = 1.0 - s_pmg / (s_pm + eps)
    main_loss = coverage * coverage_scale + excede

    # DiceLoss on thresh_binary
    thresh_loss = 1.0 - 2.0 * s_tbgm / (s_tbm + s_gm + eps)

    # MaskL1Loss on thresh (returns 0 when the mask sum is 0)
    safe_tm = jnp.where(s_tm == 0.0, 1.0, s_tm)
    l1_loss = jnp.where(s_tm == 0.0, 0.0, s_l1 / safe_tm)

    loss = main_loss + thresh_loss + l1_loss * l1_scale
    metrics = dict(coverage=coverage, excede=excede,
                   l1_loss=l1_loss, thresh_loss=thresh_loss)
    return loss, metrics


if __name__ == "__main__":
    key = jax.random.PRNGKey(0)
    N, H, W = 2, 16, 16
    ks = jax.random.split(key, 7)

    binary = jax.nn.sigmoid(jax.random.normal(ks[0], (N, 1, H, W), jnp.float32))
    thresh = jax.nn.sigmoid(jax.random.normal(ks[1], (N, 1, H, W), jnp.float32))
    thresh_binary = jax.nn.sigmoid(jax.random.normal(ks[2], (N, 1, H, W), jnp.float32))
    gt = (jax.random.uniform(ks[3], (N, 1, H, W)) > 0.5).astype(jnp.float32)
    mask = (jax.random.uniform(ks[4], (N, H, W)) > 0.3).astype(jnp.float32)
    thresh_map = jax.random.uniform(ks[5], (N, H, W), dtype=jnp.float32)
    thresh_mask = (jax.random.uniform(ks[6], (N, H, W)) > 0.3).astype(jnp.float32)

    pred = dict(binary=binary, thresh=thresh, thresh_binary=thresh_binary)
    batch = dict(gt=gt, mask=mask, thresh_map=thresh_map, thresh_mask=thresh_mask)

    loss, metrics = l1_leaky_dice_loss(pred, batch)
    loss = jax.block_until_ready(loss)

    # ---- pure-JAX reference (mirrors the PyTorch module) ----
    eps, cov_scale, l1_scale = 1e-6, 5.0, 10.0
    p2, g2 = binary[:, 0], gt[:, 0]
    cov = 1.0 - (p2 * mask * g2).sum() / ((g2 * mask).sum() + eps)
    exc = 1.0 - (p2 * mask * g2).sum() / ((p2 * mask).sum() + eps)
    main_ref = cov * cov_scale + exc
    tb2 = thresh_binary[:, 0]
    inter = (tb2 * g2 * mask).sum()
    union = (tb2 * mask).sum() + (g2 * mask).sum() + eps
    t_ref = 1.0 - 2.0 * inter / union
    msum = thresh_mask.sum()
    l1_ref = jnp.where(
        msum == 0.0, 0.0,
        (jnp.abs(thresh[:, 0] - thresh_map) * thresh_mask).sum()
        / jnp.where(msum == 0.0, 1.0, msum))
    ref = main_ref + t_ref + l1_ref * l1_scale

    err = abs(float(loss) - float(ref))
    assert err < 1e-4, f"loss mismatch: {float(loss)} vs {float(ref)} (|err|={err})"
    assert abs(float(metrics['coverage']) - float(cov)) < 1e-4
    assert abs(float(metrics['excede']) - float(exc)) < 1e-4
    assert abs(float(metrics['thresh_loss']) - float(t_ref)) < 1e-4
    assert abs(float(metrics['l1_loss']) - float(l1_ref)) < 1e-4
    print("KERNEL_OK")
</pallas_src>

<mosaic_0001>
module attributes {stable_mosaic.version = 11 : i64} {
  func.func @_partial_sums_kernel(%arg0: i32, %arg1: memref<8x128xf32, #tpu.memory_space<vmem>>, %arg2: memref<8x128xf32, #tpu.memory_space<vmem>>, %arg3: memref<8x128xf32, #tpu.memory_space<vmem>>, %arg4: memref<8x128xf32, #tpu.memory_space<vmem>>, %arg5: memref<8x128xf32, #tpu.memory_space<vmem>>, %arg6: memref<8x128xf32, #tpu.memory_space<vmem>>, %arg7: memref<8x128xf32, #tpu.memory_space<vmem>>, %arg8: memref<1x8x128xf32, #tpu.memory_space<vmem>>) attributes {dimension_semantics = [#tpu.dimension_semantics<parallel>], iteration_bounds = array<i64: 1>, scalar_prefetch = 0 : i64, scratch_operands = 0 : i64, tpu.core_type = #tpu.core_type<tc>, window_params = [{transform_indices = @transform_0, window_bounds = array<i64: 8, 128>}, {transform_indices = @transform_1, window_bounds = array<i64: 8, 128>}, {transform_indices = @transform_2, window_bounds = array<i64: 8, 128>}, {transform_indices = @transform_3, window_bounds = array<i64: 8, 128>}, {transform_indices = @transform_4, window_bounds = array<i64: 8, 128>}, {transform_indices = @transform_5, window_bounds = array<i64: 8, 128>}, {transform_indices = @transform_6, window_bounds = array<i64: 8, 128>}, {transform_indices = @transform_7, window_bounds = array<i64: 1, 8, 128>}]} {
    %c0 = arith.constant 0 : index
    %c0_0 = arith.constant 0 : index
    %0 = vector.load %arg1[%c0, %c0_0] : memref<8x128xf32, #tpu.memory_space<vmem>>, vector<8x128xf32>
    %c0_1 = arith.constant 0 : index
    %c0_2 = arith.constant 0 : index
    %1 = vector.load %arg2[%c0_1, %c0_2] : memref<8x128xf32, #tpu.memory_space<vmem>>, vector<8x128xf32>
    %c0_3 = arith.constant 0 : index
    %c0_4 = arith.constant 0 : index
    %2 = vector.load %arg3[%c0_3, %c0_4] : memref<8x128xf32, #tpu.memory_space<vmem>>, vector<8x128xf32>
    %c0_5 = arith.constant 0 : index
    %c0_6 = arith.constant 0 : index
    %3 = vector.load %arg4[%c0_5, %c0_6] : memref<8x128xf32, #tpu.memory_space<vmem>>, vector<8x128xf32>
    %c0_7 = arith.constant 0 : index
    %c0_8 = arith.constant 0 : index
    %4 = vector.load %arg5[%c0_7, %c0_8] : memref<8x128xf32, #tpu.memory_space<vmem>>, vector<8x128xf32>
    %c0_9 = arith.constant 0 : index
    %c0_10 = arith.constant 0 : index
    %5 = vector.load %arg6[%c0_9, %c0_10] : memref<8x128xf32, #tpu.memory_space<vmem>>, vector<8x128xf32>
    %c0_11 = arith.constant 0 : index
    %c0_12 = arith.constant 0 : index
    %6 = vector.load %arg7[%c0_11, %c0_12] : memref<8x128xf32, #tpu.memory_space<vmem>>, vector<8x128xf32>
    %7 = arith.mulf %0, %4 : vector<8x128xf32>
    %8 = arith.mulf %3, %4 : vector<8x128xf32>
    %9 = arith.mulf %1, %4 : vector<8x128xf32>
    %10 = arith.mulf %7, %3 : vector<8x128xf32>
    %cst = arith.constant dense<0.000000e+00> : vector<128xf32>
    %11 = vector.multi_reduction <add>, %10, %cst [0] : vector<8x128xf32> to vector<128xf32>
    %12 = vector.shape_cast %11 : vector<128xf32> to vector<1x128xf32>
    %cst_13 = arith.constant dense<0.000000e+00> : vector<128xf32>
    %13 = vector.multi_reduction <add>, %8, %cst_13 [0] : vector<8x128xf32> to vector<128xf32>
    %14 = vector.shape_cast %13 : vector<128xf32> to vector<1x128xf32>
    %cst_14 = arith.constant dense<0.000000e+00> : vector<128xf32>
    %15 = vector.multi_reduction <add>, %7, %cst_14 [0] : vector<8x128xf32> to vector<128xf32>
    %16 = vector.shape_cast %15 : vector<128xf32> to vector<1x128xf32>
    %17 = arith.mulf %9, %3 : vector<8x128xf32>
    %cst_15 = arith.constant dense<0.000000e+00> : vector<128xf32>
    %18 = vector.multi_reduction <add>, %17, %cst_15 [0] : vector<8x128xf32> to vector<128xf32>
    %19 = vector.shape_cast %18 : vector<128xf32> to vector<1x128xf32>
    %cst_16 = arith.constant dense<0.000000e+00> : vector<128xf32>
    %20 = vector.multi_reduction <add>, %9, %cst_16 [0] : vector<8x128xf32> to vector<128xf32>
    %21 = vector.shape_cast %20 : vector<128xf32> to vector<1x128xf32>
    %22 = arith.subf %2, %5 : vector<8x128xf32>
    %23 = math.absf %22 : vector<8x128xf32>
    %24 = arith.mulf %23, %6 : vector<8x128xf32>
    %cst_17 = arith.constant dense<0.000000e+00> : vector<128xf32>
    %25 = vector.multi_reduction <add>, %24, %cst_17 [0] : vector<8x128xf32> to vector<128xf32>
    %26 = vector.shape_cast %25 : vector<128xf32> to vector<1x128xf32>
    %cst_18 = arith.constant dense<0.000000e+00> : vector<128xf32>
    %27 = vector.multi_reduction <add>, %6, %cst_18 [0] : vector<8x128xf32> to vector<128xf32>
    %28 = vector.shape_cast %27 : vector<128xf32> to vector<1x128xf32>
    %cst_19 = arith.constant 0.000000e+00 : f32
    %29 = vector.broadcast %cst_19 : f32 to vector<1x128xf32>
    %30 = tpu.concatenate %12, %14, %16, %19, %21, %26, %28, %29 in 0 : vector<1x128xf32>, vector<1x128xf32>, vector<1x128xf32>, vector<1x128xf32>, vector<1x128xf32>, vector<1x128xf32>, vector<1x128xf32>, vector<1x128xf32> -> vector<8x128xf32>
    %c0_20 = arith.constant 0 : index
    %c0_21 = arith.constant 0 : index
    %c0_22 = arith.constant 0 : index
    %31 = vector.load %arg8[%c0_20, %c0_21, %c0_22] : memref<1x8x128xf32, #tpu.memory_space<vmem>>, vector<1x8x128xf32>
    %32 = vector.shape_cast %31 : vector<1x8x128xf32> to vector<8x128xf32>
    %33 = vector.shape_cast %30 : vector<8x128xf32> to vector<1x8x128xf32>
    tpu.vector_store %arg8[%c0_20, %c0_21, %c0_22], %33 {strides = array<i32>} : memref<1x8x128xf32, #tpu.memory_space<vmem>>, vector<1x8x128xf32>,
    return
  }
  func.func @transform_0(%arg0: i32) -> (i32, i32) {
    %c0_i32 = arith.constant 0 : i32
    %c0_i32_0 = arith.constant 0 : i32
    return %arg0, %c0_i32 : i32, i32
  }
  func.func @transform_1(%arg0: i32) -> (i32, i32) {
    %c0_i32 = arith.constant 0 : i32
    %c0_i32_0 = arith.constant 0 : i32
    return %arg0, %c0_i32 : i32, i32
  }
  func.func @transform_2(%arg0: i32) -> (i32, i32) {
    %c0_i32 = arith.constant 0 : i32
    %c0_i32_0 = arith.constant 0 : i32
    return %arg0, %c0_i32 : i32, i32
  }
  func.func @transform_3(%arg0: i32) -> (i32, i32) {
    %c0_i32 = arith.constant 0 : i32
    %c0_i32_0 = arith.constant 0 : i32
    return %arg0, %c0_i32 : i32, i32
  }
  func.func @transform_4(%arg0: i32) -> (i32, i32) {
    %c0_i32 = arith.constant 0 : i32
    %c0_i32_0 = arith.constant 0 : i32
    return %arg0, %c0_i32 : i32, i32
  }
  func.func @transform_5(%arg0: i32) -> (i32, i32) {
    %c0_i32 = arith.constant 0 : i32
    %c0_i32_0 = arith.constant 0 : i32
    return %arg0, %c0_i32 : i32, i32
  }
  func.func @transform_6(%arg0: i32) -> (i32, i32) {
    %c0_i32 = arith.constant 0 : i32
    %c0_i32_0 = arith.constant 0 : i32
    return %arg0, %c0_i32 : i32, i32
  }
  func.func @transform_7(%arg0: i32) -> (i32, i32, i32) {
    %c0_i32 = arith.constant 0 : i32
    %c0_i32_0 = arith.constant 0 : i32
    %c0_i32_1 = arith.constant 0 : i32
    return %arg0, %c0_i32, %c0_i32_0 : i32, i32, i32
  }
}

</mosaic_0001>

<llo_original>
// kernel: tpu_custom_call.1
$region0: #{tpu_custom_call.1}
  #allocation0 [shape = 'u32[]', space=smem, size = 0x4, offset = 0x4, fixed_abs, tag = 'smem constant byte address 0x4 - core index']
  #allocation1 [shape = 'u32[144,128]{1,0:T(1,128)}', space=vmem, size = 0x12000, scoped, tag = 'internal scratch']
  %s0 = inlined_call_operand.hbm [shape: f32[8,128], index: 0, kind: input, shape index: {}]
  %s1 = inlined_call_operand.hbm [shape: f32[8,128], index: 1, kind: input, shape index: {}]
  %s2 = inlined_call_operand.hbm [shape: f32[8,128], index: 2, kind: input, shape index: {}]
  %s3 = inlined_call_operand.vmem [shape: f32[8,128], index: 3, kind: input, shape index: {}]
  %s4 = inlined_call_operand.hbm [shape: f32[8,128], index: 4, kind: input, shape index: {}]
  %s5 = inlined_call_operand.vmem [shape: f32[8,128], index: 5, kind: input, shape index: {}]
  %s6 = inlined_call_operand.hbm [shape: f32[8,128], index: 6, kind: input, shape index: {}]
  %s7 = inlined_call_operand.hbm [shape: f32[1,8,128], index: 7, kind: output, shape index: {}]
  %s8 = sld [smem:[#allocation0]]
  $region58: #{tpu_custom_call.1} parent=0
    _
  %s10 = ssub.s32 1, %s8
  %s11 = scalar_select 0, %s10, %s8
  $region1: #{tpu_custom_call.1} parent=0
    #allocation2 [shape = 'u8[4096]{0}', space=vmem, size = 0x1000, scoped, tag = 'input window, operand 0, single buffered']
    #allocation3 [shape = 's32[1]{0}', space=sflag, size = 0x4, scoped, tag = 'scoped memory for tpu_custom_call.1']
    #allocation4 [shape = 's32[1]{0}', space=sflag, size = 0x4, scoped, tag = 'scoped memory for tpu_custom_call.1']
    #allocation5 [shape = 'u8[4096]{0}', space=vmem, size = 0x1000, scoped, tag = 'input window, operand 1, single buffered']
    #allocation6 [shape = 's32[1]{0}', space=sflag, size = 0x4, scoped, tag = 'scoped memory for tpu_custom_call.1']
    #allocation7 [shape = 'u8[4096]{0}', space=vmem, size = 0x1000, scoped, tag = 'input window, operand 2, single buffered']
    #allocation8 [shape = 'u8[4096]{0}', space=vmem, size = 0x1000, scoped, tag = 'input window, operand 4, single buffered']
    #allocation9 [shape = 's32[1]{0}', space=sflag, size = 0x4, scoped, tag = 'scoped memory for tpu_custom_call.1']
    #allocation10 [shape = 'u8[4096]{0}', space=vmem, size = 0x1000, scoped, tag = 'input window, operand 6, single buffered']
    #allocation11 [shape = 'u8[4096]{0}', space=vmem, size = 0x1000, scoped, tag = 'output window, operand 0, single buffered']
    %12 = vsyncpa [#allocation3], 0
    %13 = vsyncpa [#allocation6], 0
    %14 = vsyncpa [#allocation9], 0
    %15 = vsyncpa [#allocation4], 0
    // Predicated region
    $region2: #{tpu_custom_call.1} parent=1 // pred_check
      _
    $region3: #{tpu_custom_call.1} parent=1 // pred_check_branch
      %17 = sbr.rel (0) target = $region5
    $region4: #{tpu_custom_call.1} parent=1 // pred_region
      %s19 = ssub.s32 128, 128
      %20 = vsyncadd [#allocation3], %s19
      %s22 = sshll.u32 [#allocation2], 4
      %s23 = int_to_ptr.vmem [resolvable:$true] %s22
      %25 = dma.hbm_to_vmem [thread:$0]  %s0, 128, %s23, [#allocation3]
    $region5: #{tpu_custom_call.1} parent=1 // pred_fallthru
      _
    // Predicated region
    $region6: #{tpu_custom_call.1} parent=1 // pred_check
      _
    $region7: #{tpu_custom_call.1} parent=1 // pred_check_branch
      %27 = sbr.rel (0) target = $region9
    $region8: #{tpu_custom_call.1} parent=1 // pred_region
      %s29 = ssub.s32 128, 128
      %30 = vsyncadd [#allocation6], %s29
      %s32 = sshll.u32 [#allocation5], 4
      %s33 = int_to_ptr.vmem [resolvable:$true] %s32
      %35 = dma.hbm_to_vmem [thread:$0]  %s1, 128, %s33, [#allocation6]
    $region9: #{tpu_custom_call.1} parent=1 // pred_fallthru
      _
    // Predicated region
    $region10: #{tpu_custom_call.1} parent=1 // pred_check
      _
    $region11: #{tpu_custom_call.1} parent=1 // pred_check_branch
      %37 = sbr.rel (0) target = $region13
    $region12: #{tpu_custom_call.1} parent=1 // pred_region
      %s39 = ssub.s32 128, 128
      %40 = vsyncadd [#allocation6], %s39
      %s42 = sshll.u32 [#allocation7], 4
      %s43 = int_to_ptr.vmem [resolvable:$true] %s42
      %45 = dma.hbm_to_vmem [thread:$0]  %s2, 128, %s43, [#allocation6]
    $region13: #{tpu_custom_call.1} parent=1 // pred_fallthru
      _
    // Predicated region
    $region14: #{tpu_custom_call.1} parent=1 // pred_check
      _
    $region15: #{tpu_custom_call.1} parent=1 // pred_check_branch
      %47 = sbr.rel (0) target = $region17
    $region16: #{tpu_custom_call.1} parent=1 // pred_region
      _
    $region17: #{tpu_custom_call.1} parent=1 // pred_fallthru
      _
    // Predicated region
    $region18: #{tpu_custom_call.1} parent=1 // pred_check
      _
    $region19: #{tpu_custom_call.1} parent=1 // pred_check_branch
      %49 = sbr.rel (0) target = $region21
    $region20: #{tpu_custom_call.1} parent=1 // pred_region
      %s51 = ssub.s32 128, 128
      %52 = vsyncadd [#allocation9], %s51
      %s54 = sshll.u32 [#allocation8], 4
      %s55 = int_to_ptr.vmem [resolvable:$true] %s54
      %57 = dma.hbm_to_vmem [thread:$0]  %s4, 128, %s55, [#allocation9]
    $region21: #{tpu_custom_call.1} parent=1 // pred_fallthru
      _
    // Predicated region
    $region22: #{tpu_custom_call.1} parent=1 // pred_check
      _
    $region23: #{tpu_custom_call.1} parent=1 // pred_check_branch
      %59 = sbr.rel (0) target = $region25
    $region24: #{tpu_custom_call.1} parent=1 // pred_region
      _
    $region25: #{tpu_custom_call.1} parent=1 // pred_fallthru
      _
    // Predicated region
    $region26: #{tpu_custom_call.1} parent=1 // pred_check
      _
    $region27: #{tpu_custom_call.1} parent=1 // pred_check_branch
      %61 = sbr.rel (0) target = $region29
    $region28: #{tpu_custom_call.1} parent=1 // pred_region
      %s63 = ssub.s32 128, 128
      %64 = vsyncadd [#allocation9], %s63
      %s66 = sshll.u32 [#allocation10], 4
      %s67 = int_to_ptr.vmem [resolvable:$true] %s66
      %69 = dma.hbm_to_vmem [thread:$0]  %s6, 128, %s67, [#allocation9]
    $region29: #{tpu_custom_call.1} parent=1 // pred_fallthru
      _
    // Predicated region
    $region30: #{tpu_custom_call.1} parent=1 // pred_check
      _
    $region31: #{tpu_custom_call.1} parent=1 // pred_check_branch
      %71 = sbr.rel (0) target = $region33
    $region32: #{tpu_custom_call.1} parent=1 // pred_region
      %72 = dma.done [#allocation3], 128
    $region33: #{tpu_custom_call.1} parent=1 // pred_fallthru
      _
    // Predicated region
    $region34: #{tpu_custom_call.1} parent=1 // pred_check
      _
    $region35: #{tpu_custom_call.1} parent=1 // pred_check_branch
      %74 = sbr.rel (0) target = $region37
    $region36: #{tpu_custom_call.1} parent=1 // pred_region
      %75 = dma.done [#allocation6], 128
    $region37: #{tpu_custom_call.1} parent=1 // pred_fallthru
      _
    // Predicated region
    $region38: #{tpu_custom_call.1} parent=1 // pred_check
      _
    $region39: #{tpu_custom_call.1} parent=1 // pred_check_branch
      %77 = sbr.rel (0) target = $region41
    $region40: #{tpu_custom_call.1} parent=1 // pred_region
      %78 = dma.done [#allocation6], 128
    $region41: #{tpu_custom_call.1} parent=1 // pred_fallthru
      _
    // Predicated region
    $region42: #{tpu_custom_call.1} parent=1 // pred_check
      _
    $region43: #{tpu_custom_call.1} parent=1 // pred_check_branch
      %80 = sbr.rel (0) target = $region45
    $region44: #{tpu_custom_call.1} parent=1 // pred_region
      %81 = dma.done [#allocation9], 128
    $region45: #{tpu_custom_call.1} parent=1 // pred_fallthru
      _
    // Predicated region
    $region46: #{tpu_custom_call.1} parent=1 // pred_check
      _
    $region47: #{tpu_custom_call.1} parent=1 // pred_check_branch
      %83 = sbr.rel (0) target = $region49
    $region48: #{tpu_custom_call.1} parent=1 // pred_region
      %84 = dma.done [#allocation9], 128
    $region49: #{tpu_custom_call.1} parent=1 // pred_fallthru
      _
    %v85 = vld [vmem:[#allocation2] sm:$0xff]
    %v86 = vld [vmem:[#allocation5] sm:$0xff]
    %v87 = vld [vmem:[#allocation7] sm:$0xff]
    %v88 = vld [vmem:[%s3] sm:$0xff]
    %v89 = vld [vmem:[#allocation8] sm:$0xff]
    %v90 = vld [vmem:[%s5] sm:$0xff]
    %v91 = vld [vmem:[#allocation10] sm:$0xff]
    %v92 = vmul.f32 %v85, %v89
    %v93 = vmul.f32 %v88, %v89
    %v94 = vmul.f32 %v86, %v89
    %v95 = vmul.f32 %v92, %v88
    %v96 = vrot.slane %v95, 4
    %v97 = vadd.f32 %v95, %v96
    %v98 = vrot.slane %v97, 2
    %v99 = vadd.f32 %v97, %v98
    %v100 = vrot.slane %v99, 1
    %v101 = vadd.f32 %v99, %v100
    %v102 = vrot.slane %v93, 4
    %v103 = vadd.f32 %v93, %v102
    %v104 = vrot.slane %v103, 2
    %v105 = vadd.f32 %v103, %v104
    %v106 = vrot.slane %v105, 1
    %v107 = vadd.f32 %v105, %v106
    %v108 = vrot.slane %v92, 4
    %v109 = vadd.f32 %v92, %v108
    %v110 = vrot.slane %v109, 2
    %v111 = vadd.f32 %v109, %v110
    %v112 = vrot.slane %v111, 1
    %v113 = vadd.f32 %v111, %v112
    %v114 = vmul.f32 %v94, %v88
    %v115 = vrot.slane %v114, 4
    %v116 = vadd.f32 %v114, %v115
    %v117 = vrot.slane %v116, 2
    %v118 = vadd.f32 %v116, %v117
    %v119 = vrot.slane %v118, 1
    %v120 = vadd.f32 %v118, %v119
    %v121 = vrot.slane %v94, 4
    %v122 = vadd.f32 %v94, %v121
    %v123 = vrot.slane %v122, 2
    %v124 = vadd.f32 %v122, %v123
    %v125 = vrot.slane %v124, 1
    %v126 = vadd.f32 %v124, %v125
    %v127 = vsub.f32 %v87, %v90
    %v128 = vand.u32 2147483647, %v127
    %v129 = vmul.f32 %v128, %v91
    %v130 = vrot.slane %v129, 4
    %v131 = vadd.f32 %v129, %v130
    %v132 = vrot.slane %v131, 2
    %v133 = vadd.f32 %v131, %v132
    %v134 = vrot.slane %v133, 1
    %v135 = vadd.f32 %v133, %v134
    %v136 = vrot.slane %v91, 4
    %v137 = vadd.f32 %v91, %v136
    %v138 = vrot.slane %v137, 2
    %v139 = vadd.f32 %v137, %v138
    %v140 = vrot.slane %v139, 1
    %v141 = vadd.f32 %v139, %v140
    %vm142 = vcmask 1040384
    %v143 = vsel %vm142, %v101, %v107
    %vm144 = vcmask 1041408
    %v145 = vsel %vm144, %v143, %v113
    %vm146 = vcmask 1042432
    %v147 = vsel %vm146, %v145, %v120
    %vm148 = vcmask 1043456
    %v149 = vsel %vm148, %v147, %v126
    %vm150 = vcmask 1044480
    %v151 = vsel %vm150, %v149, %v135
    %vm152 = vcmask 1045504
    %v153 = vsel %vm152, %v151, %v141
    %vm154 = vcmask 1046528
    %v155 = vsel %vm154, %v153, 0.0
    %156 = vst [vmem:[#allocation11] sm:$0xff] %v155
    // Predicated region
    $region50: #{tpu_custom_call.1} parent=1 // pred_check
      _
    $region51: #{tpu_custom_call.1} parent=1 // pred_check_branch
      %158 = sbr.rel (0) target = $region53
    $region52: #{tpu_custom_call.1} parent=1 // pred_region
      %s160 = ssub.s32 128, 128
      %161 = vsyncadd [#allocation4], %s160
      %s163 = sshll.u32 [#allocation11], 4
      %s164 = int_to_ptr.vmem [resolvable:$true] %s163
      %166 = dma.vmem_to_hbm [thread:$0]  %s164, 128, %s7, [#allocation4]
    $region53: #{tpu_custom_call.1} parent=1 // pred_fallthru
      _
    // Predicated region
    $region54: #{tpu_custom_call.1} parent=1 // pred_check
      _
    $region55: #{tpu_custom_call.1} parent=1 // pred_check_branch
      %168 = sbr.rel (0) target = $region57
    $region56: #{tpu_custom_call.1} parent=1 // pred_region
      %169 = dma.done [#allocation4], 128
    $region57: #{tpu_custom_call.1} parent=1 // pred_fallthru
      _
    %170 = vsyncpa [#allocation3], 1
    %171 = vsyncpa [#allocation6], 1
    %172 = vsyncpa [#allocation9], 1
    %173 = vsyncpa [#allocation4], 1

</llo_original>
